<compile_context>
chip_gen: v5e
topology: v5e:2x2
jax: 0.10.0
libtpu: 0.0.40
codegen_flags: <defaults>
</compile_context>

<pallas_src>
import functools
import math

import jax
import jax.numpy as jnp
from jax.experimental import pallas as pl
from jax.experimental.pallas import tpu as pltpu

EPS = float(jnp.finfo(jnp.float32).eps)   # == torch.finfo(torch.float).eps
_LOG10_SCALE = 20.0 / math.log(10.0)      # 20*log10(x) == _LOG10_SCALE * ln(x)


def _round_up(x, m):
    return ((x + m - 1) // m) * m


def _hamming_window(win_length):
    # torch.hamming_window default: periodic=True, alpha=0.54, beta=0.46
    n = jnp.arange(win_length, dtype=jnp.float32)
    return 0.54 - 0.46 * jnp.cos(2.0 * jnp.pi * n / win_length)


def _folded_dft_basis(n_fft, n_freq_pad):
    """Stacked [cos ; sin] real-DFT basis, shape (2*n_freq_pad, n_fft).

    The hamming window and the 1/sqrt(n_fft) power normalisation are folded in,
    so power = re^2 + im^2 already equals |X|^2 / n_fft.
    """
    n_freq = n_fft // 2 + 1
    window = _hamming_window(n_fft)                               # (n_fft,)
    f = jnp.arange(n_freq, dtype=jnp.float32)[:, None]            # (n_freq, 1)
    n = jnp.arange(n_fft, dtype=jnp.float32)[None, :]             # (1, n_fft)
    ang = 2.0 * jnp.pi * f * n / n_fft
    scale = window[None, :] / jnp.sqrt(jnp.float32(n_fft))        # (1, n_fft)
    cos_t = jnp.cos(ang) * scale                                  # (n_freq, n_fft)
    sin_t = jnp.sin(ang) * scale
    pad = n_freq_pad - n_freq
    cos_t = jnp.pad(cos_t, ((0, pad), (0, 0)))
    sin_t = jnp.pad(sin_t, ((0, pad), (0, 0)))
    return jnp.concatenate([cos_t, sin_t], axis=0)                # (2*n_freq_pad, n_fft)


def _log_power_kernel(frames_ref, basis_ref, a_ref, b_ref, out_ref, *, n_freq_pad):
    # frames_ref: (n_fft, tm)          frames on lanes
    # basis_ref : (2*n_freq_pad, n_fft) folded [cos ; sin] basis (constant, resident)
    # a_ref/b_ref: (n_freq_pad, 1)     per-frequency affine (20/ln10 scale + CMVN)
    # out_ref   : (n_freq_pad, tm)     freq on sublanes, frames on lanes (lane-dense)
    reim = jnp.dot(basis_ref[...], frames_ref[...],
                   preferred_element_type=jnp.float32)            # (2*n_freq_pad, tm)
    re = reim[:n_freq_pad, :]
    im = reim[n_freq_pad:, :]
    power = re * re + im * im                                     # == |X|^2 / n_fft
    out_ref[...] = jnp.log(power + EPS) * a_ref[...] + b_ref[...]


@functools.partial(jax.jit,
                   static_argnames=("n_fft", "hop_length", "win_length", "max_tile"))
def log_power_spectrum(x, length=None, *, n_fft=128, hop_length=32, win_length=None,
                       mean=0.0, std=1.0, max_tile=1024):
    """Equivalent of LogPowerSpectrum.forward (both_complex_and_notComplex=False).

    x: (B, T) or (T,) waveform (int16-PCM scale).
    Returns (log_power, length) with log_power of shape (B, n_freq, n_frames)
    matching torch.stft's (batch, freq_bins, time_frames) convention.
    """
    win_length = n_fft if win_length is None else win_length
    assert win_length == n_fft, "kernel assumes win_length == n_fft (PyTorch default)"

    squeeze = (x.ndim == 1)
    if squeeze:
        x = x[None, :]
    x = x.astype(jnp.float32)
    B, T = x.shape
    wave = x * (1.0 / 2.0 ** 15)

    # --- padding exactly as batch_short_time_fourier_transform ---
    left = n_fft - hop_length
    right = 0 if (T % hop_length == 0) else (hop_length - T % hop_length)
    wave = jnp.pad(wave, ((0, 0), (left, right)))
    L = wave.shape[1]
    n_frames = 1 + (L - n_fft) // hop_length          # == ceil(T / hop_length)
    n_freq = n_fft // 2 + 1
    n_freq_pad = _round_up(n_freq, 8)                 # clean sublane split of [re ; im]

    # --- tiling: frames live on the lane axis -> tile is a multiple of 128 ---
    tm = min(max_tile, _round_up(n_frames, 128))
    f_pad = _round_up(n_frames, tm)
    grid = (B, f_pad // tm)

    # --- frame extraction (pre-transposed so no post-kernel transpose is needed) ---
    # TODO(synk): framing stays in XLA glue; an in-kernel DMA framing path would cut
    # HBM traffic a further ~n_fft/hop x for long signals.
    starts = jnp.arange(f_pad, dtype=jnp.int32) * hop_length
    sample_idx = jnp.arange(n_fft, dtype=jnp.int32)[:, None] + starts[None, :]
    sample_idx = jnp.minimum(sample_idx, L - 1)       # clamp the padded tail frames
    frames_t = wave[:, sample_idx]                    # (B, n_fft, f_pad)

    basis_t = _folded_dft_basis(n_fft, n_freq_pad)    # (2*n_freq_pad, n_fft)

    # --- fold CMVN + 20/ln(10) into a per-frequency affine: y = a*ln(p+eps) + b ---
    mean_v = jnp.broadcast_to(jnp.asarray(mean, jnp.float32).reshape(-1, 1), (n_freq, 1))
    std_v = jnp.broadcast_to(jnp.asarray(std, jnp.float32).reshape(-1, 1), (n_freq, 1))
    inv = 1.0 / (std_v + EPS)
    a = jnp.pad(_LOG10_SCALE * inv, ((0, n_freq_pad - n_freq), (0, 0)))
    b = jnp.pad(-mean_v * inv, ((0, n_freq_pad - n_freq), (0, 0)))

    kernel = functools.partial(_log_power_kernel, n_freq_pad=n_freq_pad)

    cost = pl.CostEstimate(
        flops=int(2 * B * f_pad * n_fft * (2 * n_freq_pad) + 4 * B * f_pad * n_freq_pad),
        transcendentals=int(B * f_pad * n_freq_pad),
        bytes_accessed=int((frames_t.size + basis_t.size + B * n_freq_pad * f_pad) * 4),
    )

    out = pl.pallas_call(
        kernel,
        out_shape=jax.ShapeDtypeStruct((B, n_freq_pad, f_pad), jnp.float32),
        grid=grid,
        in_specs=[
            pl.BlockSpec((None, n_fft, tm), lambda bi, fi: (bi, 0, fi)),    # frames tile
            pl.BlockSpec((2 * n_freq_pad, n_fft), lambda bi, fi: (0, 0)),   # basis (resident)
            pl.BlockSpec((n_freq_pad, 1), lambda bi, fi: (0, 0)),           # a
            pl.BlockSpec((n_freq_pad, 1), lambda bi, fi: (0, 0)),           # b
        ],
        out_specs=pl.BlockSpec((None, n_freq_pad, tm), lambda bi, fi: (bi, 0, fi)),
        compiler_params=pltpu.CompilerParams(
            dimension_semantics=("parallel", "parallel")),
        cost_estimate=cost,
    )(frames_t, basis_t, a, b)

    log_power = out[:, :n_freq, :n_frames]            # drop freq / frame padding

    if length is not None:
        length = jnp.ceil(length / hop_length)
    if squeeze:
        log_power = log_power[0]
    return log_power, length


if __name__ == "__main__":
    key = jax.random.PRNGKey(0)
    B, T = 2, 256
    n_fft, hop = 128, 32
    # waveform-scale input (like int16 PCM values)
    x = jax.random.normal(key, (B, T), dtype=jnp.float32) * 1000.0

    lp, _ = log_power_spectrum(x, n_fft=n_fft, hop_length=hop)
    jax.block_until_ready(lp)

    # pure-JAX reference of the same math (torch.stft center=False, hamming window)
    wave = x / 2.0 ** 15
    wav_p = jnp.pad(wave, ((0, 0), (n_fft - hop, 0)))
    F = 1 + (wav_p.shape[1] - n_fft) // hop
    idx = (jnp.arange(F) * hop)[:, None] + jnp.arange(n_fft)[None, :]
    win = 0.54 - 0.46 * jnp.cos(2.0 * jnp.pi * jnp.arange(n_fft) / n_fft)
    fr = wav_p[:, idx] * win[None, None, :]
    n_freq = n_fft // 2 + 1
    ang = (2.0 * jnp.pi / n_fft) * jnp.arange(n_fft, dtype=jnp.float32)[:, None] \
          * jnp.arange(n_freq, dtype=jnp.float32)[None, :]
    re = jnp.einsum("bfn,nk->bfk", fr, jnp.cos(ang))
    im = jnp.einsum("bfn,nk->bfk", fr, jnp.sin(ang))
    power = (re ** 2 + im ** 2) / n_fft
    ref = ((20.0 * jnp.log10(power + EPS) - 0.0) / (1.0 + EPS)).transpose(0, 2, 1)

    assert lp.shape == (B, n_freq, F), lp.shape
    err = float(jnp.max(jnp.abs(lp - ref)))
    assert jnp.allclose(lp, ref, atol=2e-3, rtol=2e-3), err

    print("KERNEL_OK")
</pallas_src>

<mosaic_0001>
module attributes {stable_mosaic.version = 11 : i64} {
  func.func @_log_power_kernel(%arg0: i32, %arg1: i32, %arg2: memref<1x128x128xf32, #tpu.memory_space<vmem>>, %arg3: memref<144x128xf32, #tpu.memory_space<vmem>>, %arg4: memref<72x1xf32, #tpu.memory_space<vmem>>, %arg5: memref<72x1xf32, #tpu.memory_space<vmem>>, %arg6: memref<1x72x128xf32, #tpu.memory_space<vmem>>) attributes {dimension_semantics = [#tpu.dimension_semantics<parallel>, #tpu.dimension_semantics<parallel>], iteration_bounds = array<i64: 2, 1>, scalar_prefetch = 0 : i64, scratch_operands = 0 : i64, tpu.core_type = #tpu.core_type<tc>, window_params = [{transform_indices = @transform_0, window_bounds = array<i64: 1, 128, 128>}, {pipeline_mode = #tpu.pipeline_mode<synchronous>, transform_indices = @transform_1, window_bounds = array<i64: 144, 128>}, {pipeline_mode = #tpu.pipeline_mode<synchronous>, transform_indices = @transform_2, window_bounds = array<i64: 72, 1>}, {pipeline_mode = #tpu.pipeline_mode<synchronous>, transform_indices = @transform_3, window_bounds = array<i64: 72, 1>}, {transform_indices = @transform_4, window_bounds = array<i64: 1, 72, 128>}]} {
    %c0 = arith.constant 0 : index
    %c0_0 = arith.constant 0 : index
    %0 = vector.load %arg3[%c0, %c0_0] : memref<144x128xf32, #tpu.memory_space<vmem>>, vector<144x128xf32>
    %c0_1 = arith.constant 0 : index
    %c0_2 = arith.constant 0 : index
    %c0_3 = arith.constant 0 : index
    %1 = vector.load %arg2[%c0_1, %c0_2, %c0_3] : memref<1x128x128xf32, #tpu.memory_space<vmem>>, vector<1x128x128xf32>
    %2 = vector.shape_cast %1 : vector<1x128x128xf32> to vector<128x128xf32>
    %cst = arith.constant dense<0.000000e+00> : vector<144x128xf32>
    %3 = tpu.matmul %0, %2, %cst {dimension_numbers = #tpu.dot_dimension_numbers<[1], [0], [0], [1], [0, 0, 1, 1], [], []>} : vector<144x128xf32>, vector<128x128xf32>, vector<144x128xf32> -> vector<144x128xf32>
    %4 = vector.extract_strided_slice %3 {offsets = [0, 0], sizes = [72, 128], strides = [1, 1]} : vector<144x128xf32> to vector<72x128xf32>
    %5 = vector.extract_strided_slice %3 {offsets = [72, 0], sizes = [72, 128], strides = [1, 1]} : vector<144x128xf32> to vector<72x128xf32>
    %6 = arith.mulf %4, %4 : vector<72x128xf32>
    %7 = arith.mulf %5, %5 : vector<72x128xf32>
    %8 = arith.addf %6, %7 : vector<72x128xf32>
    %cst_4 = arith.constant 1.1920929E-7 : f32
    %9 = vector.broadcast %cst_4 : f32 to vector<72x128xf32>
    %10 = arith.addf %8, %9 : vector<72x128xf32>
    %11 = math.log %10 : vector<72x128xf32>
    %c0_5 = arith.constant 0 : index
    %c0_6 = arith.constant 0 : index
    %12 = vector.load %arg4[%c0_5, %c0_6] : memref<72x1xf32, #tpu.memory_space<vmem>>, vector<72x1xf32>
    %13 = vector.broadcast %12 : vector<72x1xf32> to vector<72x128xf32>
    %14 = arith.mulf %11, %13 : vector<72x128xf32>
    %c0_7 = arith.constant 0 : index
    %c0_8 = arith.constant 0 : index
    %15 = vector.load %arg5[%c0_7, %c0_8] : memref<72x1xf32, #tpu.memory_space<vmem>>, vector<72x1xf32>
    %16 = vector.broadcast %15 : vector<72x1xf32> to vector<72x128xf32>
    %17 = arith.addf %14, %16 : vector<72x128xf32>
    %c0_9 = arith.constant 0 : index
    %c0_10 = arith.constant 0 : index
    %c0_11 = arith.constant 0 : index
    %18 = vector.load %arg6[%c0_9, %c0_10, %c0_11] : memref<1x72x128xf32, #tpu.memory_space<vmem>>, vector<1x72x128xf32>
    %19 = vector.shape_cast %18 : vector<1x72x128xf32> to vector<72x128xf32>
    %20 = vector.shape_cast %17 : vector<72x128xf32> to vector<1x72x128xf32>
    tpu.vector_store %arg6[%c0_9, %c0_10, %c0_11], %20 {strides = array<i32>} : memref<1x72x128xf32, #tpu.memory_space<vmem>>, vector<1x72x128xf32>,
    return
  }
  func.func @transform_0(%arg0: i32, %arg1: i32) -> (i32, i32, i32) {
    %c0_i32 = arith.constant 0 : i32
    %c0_i32_0 = arith.constant 0 : i32
    return %arg0, %c0_i32, %arg1 : i32, i32, i32
  }
  func.func @transform_1(%arg0: i32, %arg1: i32) -> (i32, i32) {
    %c0_i32 = arith.constant 0 : i32
    %c0_i32_0 = arith.constant 0 : i32
    %c0_i32_1 = arith.constant 0 : i32
    return %c0_i32, %c0_i32_0 : i32, i32
  }
  func.func @transform_2(%arg0: i32, %arg1: i32) -> (i32, i32) {
    %c0_i32 = arith.constant 0 : i32
    %c0_i32_0 = arith.constant 0 : i32
    %c0_i32_1 = arith.constant 0 : i32
    return %c0_i32, %c0_i32_0 : i32, i32
  }
  func.func @transform_3(%arg0: i32, %arg1: i32) -> (i32, i32) {
    %c0_i32 = arith.constant 0 : i32
    %c0_i32_0 = arith.constant 0 : i32
    %c0_i32_1 = arith.constant 0 : i32
    return %c0_i32, %c0_i32_0 : i32, i32
  }
  func.func @transform_4(%arg0: i32, %arg1: i32) -> (i32, i32, i32) {
    %c0_i32 = arith.constant 0 : i32
    %c0_i32_0 = arith.constant 0 : i32
    return %arg0, %c0_i32, %arg1 : i32, i32, i32
  }
}

</mosaic_0001>

<llo_original>
// kernel: mul.28
$region0: #{mul.28}
  #allocation0 [shape = 's32[1]{0}', space=sflag, size = 0x4, scoped, tag = 'scoped memory for mul.28']
  %s0 = inlined_call_operand.<no memory space> [shape: f32[], index: 0, kind: input, shape index: {}]
  %s1 = inlined_call_operand.vmem [shape: f32[65], index: 1, kind: output, shape index: {}]
  %v2 = vstv %s0
  %3 = vst [vmem:[%s1] sm:$0x1] %v2

</llo_original>
